<compile_context>
chip_gen: v6e
topology: v6e:2x2x1
jax: 0.10.0
libtpu: 0.0.40
codegen_flags: <defaults>
</compile_context>

<pallas_src>
import jax
import jax.numpy as jnp
from jax.experimental import pallas as pl
from jax.experimental.pallas import tpu as pltpu


def _bootstrap_cls_kernel(x_ref, w_ref, b_ref, o_ref):
    # x_ref: (TILE_B, F) VMEM, w_ref: (1, F) VMEM, b_ref: (1, 1) SMEM,
    # o_ref: (TILE_B, 1) VMEM
    x = x_ref[...]
    w = w_ref[...]
    b = b_ref[0, 0]                       # scalar bias from SMEM
    # VPU elementwise multiply + XLU lane reduce; bias add on the (TILE_B, 1) result.
    z = jnp.sum(x * w, axis=-1, keepdims=True) + b
    # Sigmoid: exp rides the EUP slot; the divide acts on a tiny (TILE_B, 1) array.
    o_ref[...] = (1.0 / (1.0 + jnp.exp(-z))).astype(o_ref.dtype)


def _pick_tile_b(B, F, itemsize, vmem_budget_bytes=8 * 1024 * 1024):
    """Pick a batch tile: as large as possible (>=512 when B allows) while keeping
    the double-buffered x tile (2 * tile_b * F * itemsize bytes) well under the
    scoped-VMEM limit, so the same tiling is safe on v5e/v6e (128 MiB) and
    v7x (64 MiB physical VMEM)."""
    rows = vmem_budget_bytes // (2 * F * itemsize)
    rows = max(8, min(int(rows), 1024))
    rows -= rows % 8                      # keep the (8, 128) sublane rule happy
    if rows >= B:
        return B                          # single full-extent block (always legal)
    return rows


def bootstrap_classification(x, weight, bias, *, tile_b=None):
    """Pallas equivalent of torch.sigmoid(nn.Linear(n_features, 1)(x)).

    x:      (B, F) float32
    weight: (1, F) float32   (PyTorch Linear weight layout, kept as-is)
    bias:   (1,)   float32
    returns (B, 1) float32
    """
    B, F = x.shape
    w = weight.reshape(1, F).astype(x.dtype)
    b = bias.reshape(1, 1).astype(jnp.float32)

    if tile_b is None:
        tile_b = _pick_tile_b(B, F, jnp.dtype(x.dtype).itemsize)

    grid = (pl.cdiv(B, tile_b),)

    # TODO(synk): optionally feed x as bfloat16 upstream to halve HBM traffic
    # (kernel would upcast before the multiply); kept f32 to match module dtype.
    return pl.pallas_call(
        _bootstrap_cls_kernel,
        out_shape=jax.ShapeDtypeStruct((B, 1), x.dtype),
        grid=grid,
        in_specs=[
            pl.BlockSpec((tile_b, F), lambda i: (i, 0)),                 # x tile
            pl.BlockSpec((1, F), lambda i: (0, 0)),                      # weight (resident)
            pl.BlockSpec(memory_space=pltpu.MemorySpace.SMEM),           # bias scalar
        ],
        out_specs=pl.BlockSpec((tile_b, 1), lambda i: (i, 0)),
        compiler_params=pltpu.CompilerParams(
            dimension_semantics=("parallel",),
        ),
    )(x, w, b)


def bootstrap_classification_ref(x, weight, bias):
    # pure-JAX reference (matches PyTorch semantics)
    return jax.nn.sigmoid(x @ weight.T + bias)


if __name__ == "__main__":
    key = jax.random.PRNGKey(0)
    kx, kw, kb = jax.random.split(key, 3)

    # Small shape consistent with the module.
    batch = 8
    n_features = 32

    x = jax.random.normal(kx, (batch, n_features), dtype=jnp.float32)
    # deterministic parameter init (mimics nn.Linear uniform init bounds)
    bound = 1.0 / (n_features ** 0.5)
    weight = jax.random.uniform(kw, (1, n_features), minval=-bound, maxval=bound,
                                dtype=jnp.float32)
    bias = jax.random.uniform(kb, (1,), minval=-bound, maxval=bound,
                              dtype=jnp.float32)

    out = bootstrap_classification(x, weight, bias)
    out = jax.block_until_ready(out)
    ref = bootstrap_classification_ref(x, weight, bias)
    assert out.shape == (batch, 1)
    assert jnp.allclose(out, ref, atol=1e-5, rtol=1e-5)

    # Second check at a shape that exercises batch tiling + a partial tail tile.
    kx2, kw2, kb2 = jax.random.split(jax.random.PRNGKey(1), 3)
    B2, F2 = 1030, 256
    x2 = jax.random.normal(kx2, (B2, F2), dtype=jnp.float32)
    bound2 = 1.0 / (F2 ** 0.5)
    w2 = jax.random.uniform(kw2, (1, F2), minval=-bound2, maxval=bound2,
                            dtype=jnp.float32)
    b2 = jax.random.uniform(kb2, (1,), minval=-bound2, maxval=bound2,
                            dtype=jnp.float32)
    out2 = jax.block_until_ready(bootstrap_classification(x2, w2, b2))
    ref2 = bootstrap_classification_ref(x2, w2, b2)
    assert out2.shape == (B2, 1)
    assert jnp.allclose(out2, ref2, atol=1e-5, rtol=1e-5)

    print("KERNEL_OK")
</pallas_src>

<mosaic_0001>
module attributes {stable_mosaic.version = 11 : i64} {
  func.func @_bootstrap_cls_kernel(%arg0: i32, %arg1: memref<8x32xf32, #tpu.memory_space<vmem>>, %arg2: memref<1x32xf32, #tpu.memory_space<vmem>>, %arg3: memref<1x1xf32, #tpu.memory_space<smem>>, %arg4: memref<8x1xf32, #tpu.memory_space<vmem>>) attributes {dimension_semantics = [#tpu.dimension_semantics<parallel>], iteration_bounds = array<i64: 1>, scalar_prefetch = 0 : i64, scratch_operands = 0 : i64, tpu.core_type = #tpu.core_type<tc>, window_params = [{transform_indices = @transform_0, window_bounds = array<i64: 8, 32>}, {pipeline_mode = #tpu.pipeline_mode<synchronous>, transform_indices = @transform_1, window_bounds = array<i64: 1, 32>}, {transform_indices = @transform_2, window_bounds = array<i64: 1, 1>}, {transform_indices = @transform_3, window_bounds = array<i64: 8, 1>}]} {
    %c0 = arith.constant 0 : index
    %c0_0 = arith.constant 0 : index
    %0 = vector.load %arg1[%c0, %c0_0] : memref<8x32xf32, #tpu.memory_space<vmem>>, vector<8x32xf32>
    %c0_1 = arith.constant 0 : index
    %c0_2 = arith.constant 0 : index
    %1 = vector.load %arg2[%c0_1, %c0_2] : memref<1x32xf32, #tpu.memory_space<vmem>>, vector<1x32xf32>
    %c0_3 = arith.constant 0 : index
    %c0_4 = arith.constant 0 : index
    %2 = memref.load %arg3[%c0_3, %c0_4] : memref<1x1xf32, #tpu.memory_space<smem>>
    %3 = vector.broadcast %1 : vector<1x32xf32> to vector<8x32xf32>
    %4 = arith.mulf %0, %3 : vector<8x32xf32>
    %cst = arith.constant dense<0.000000e+00> : vector<8xf32>
    %5 = vector.multi_reduction <add>, %4, %cst [1] : vector<8x32xf32> to vector<8xf32>
    %6 = vector.shape_cast %5 : vector<8xf32> to vector<8x1xf32>
    %7 = vector.broadcast %2 : f32 to vector<8x1xf32>
    %8 = arith.addf %6, %7 : vector<8x1xf32>
    %cst_5 = arith.constant 0.000000e+00 : f32
    %9 = vector.broadcast %cst_5 : f32 to vector<8x1xf32>
    %10 = arith.subf %9, %8 : vector<8x1xf32>
    %11 = math.exp %10 : vector<8x1xf32>
    %cst_6 = arith.constant 1.000000e+00 : f32
    %12 = vector.broadcast %cst_6 : f32 to vector<8x1xf32>
    %13 = arith.addf %12, %11 : vector<8x1xf32>
    %cst_7 = arith.constant 1.000000e+00 : f32
    %14 = vector.broadcast %cst_7 : f32 to vector<8x1xf32>
    %15 = arith.divf %14, %13 : vector<8x1xf32>
    %c0_8 = arith.constant 0 : index
    %c0_9 = arith.constant 0 : index
    %16 = vector.load %arg4[%c0_8, %c0_9] : memref<8x1xf32, #tpu.memory_space<vmem>>, vector<8x1xf32>
    tpu.vector_store %arg4[%c0_8, %c0_9], %15 {strides = array<i32>} : memref<8x1xf32, #tpu.memory_space<vmem>>, vector<8x1xf32>,
    return
  }
  func.func @transform_0(%arg0: i32) -> (i32, i32) {
    %c0_i32 = arith.constant 0 : i32
    %c0_i32_0 = arith.constant 0 : i32
    return %arg0, %c0_i32 : i32, i32
  }
  func.func @transform_1(%arg0: i32) -> (i32, i32) {
    %c0_i32 = arith.constant 0 : i32
    %c0_i32_0 = arith.constant 0 : i32
    %c0_i32_1 = arith.constant 0 : i32
    return %c0_i32, %c0_i32_0 : i32, i32
  }
  func.func @transform_2(%arg0: i32) -> (i32, i32) {
    %c0_i32 = arith.constant 0 : i32
    %c0_i32_0 = arith.constant 0 : i32
    %c0_i32_1 = arith.constant 0 : i32
    return %c0_i32, %c0_i32_0 : i32, i32
  }
  func.func @transform_3(%arg0: i32) -> (i32, i32) {
    %c0_i32 = arith.constant 0 : i32
    %c0_i32_0 = arith.constant 0 : i32
    return %arg0, %c0_i32 : i32, i32
  }
}

</mosaic_0001>

<llo_original>
// kernel: tpu_custom_call.1
$region0: #{tpu_custom_call.1}
  #allocation0 [shape = 'u32[]', space=smem, size = 0x4, offset = 0x4, fixed_abs, tag = 'smem constant byte address 0x4 - core index']
  #allocation1 [shape = 'u32[144,128]{1,0:T(1,128)}', space=vmem, size = 0x12000, scoped, tag = 'internal scratch']
  #allocation2 [shape = 'f32[1,1]{1,0:T(1,128)S(6)}', space=smem, size = 0x200, scoped, tag = 'scoped memory for tpu_custom_call.1']
  %s0 = inlined_call_operand.hbm [shape: f32[8,32], index: 0, kind: input, shape index: {}]
  %s1 = inlined_call_operand.vmem [shape: f32[1,32], index: 1, kind: input, shape index: {}]
  %s2 = inlined_call_operand.<no memory space> [shape: f32[1,1], index: 2, kind: input, shape index: {}]
  %s3 = inlined_call_operand.vmem [shape: f32[8,1], index: 3, kind: output, shape index: {}]
  %s4 = sld [smem:[#allocation0]]
  $region26: #{tpu_custom_call.1} parent=0
    _
  %s6 = ssub.s32 1, %s4
  %s7 = scalar_select 0, %s6, %s4
  %8 = sst [smem:[#allocation2]] %s2
  $region1: #{tpu_custom_call.1} parent=0
    #allocation3 [shape = 'u8[4096]{0}', space=vmem, size = 0x1000, scoped, tag = 'input window, operand 0, single buffered']
    #allocation4 [shape = 's32[1]{0}', space=sflag, size = 0x4, scoped, tag = 'scoped memory for tpu_custom_call.1']
    %9 = vsyncpa [#allocation4], 0
    // Predicated region
    $region2: #{tpu_custom_call.1} parent=1 // pred_check
      _
    $region3: #{tpu_custom_call.1} parent=1 // pred_check_branch
      %11 = sbr.rel (0) target = $region5
    $region4: #{tpu_custom_call.1} parent=1 // pred_region
      %s13 = ssub.s32 128, 128
      %14 = vsyncadd [#allocation4], %s13
      %s16 = sshll.u32 [#allocation3], 4
      %s17 = int_to_ptr.vmem [resolvable:$true] %s16
      %19 = dma.hbm_to_vmem [thread:$0]  %s0, 128, %s17, [#allocation4]
    $region5: #{tpu_custom_call.1} parent=1 // pred_fallthru
      _
    // Predicated region
    $region6: #{tpu_custom_call.1} parent=1 // pred_check
      _
    $region7: #{tpu_custom_call.1} parent=1 // pred_check_branch
      %21 = sbr.rel (0) target = $region9
    $region8: #{tpu_custom_call.1} parent=1 // pred_region
      _
    $region9: #{tpu_custom_call.1} parent=1 // pred_fallthru
      _
    // Predicated region
    $region10: #{tpu_custom_call.1} parent=1 // pred_check
      _
    $region11: #{tpu_custom_call.1} parent=1 // pred_check_branch
      %23 = sbr.rel (0) target = $region13
    $region12: #{tpu_custom_call.1} parent=1 // pred_region
      _
    $region13: #{tpu_custom_call.1} parent=1 // pred_fallthru
      _
    // Predicated region
    $region14: #{tpu_custom_call.1} parent=1 // pred_check
      _
    $region15: #{tpu_custom_call.1} parent=1 // pred_check_branch
      %25 = sbr.rel (0) target = $region17
    $region16: #{tpu_custom_call.1} parent=1 // pred_region
      %26 = dma.done [#allocation4], 128
    $region17: #{tpu_custom_call.1} parent=1 // pred_fallthru
      _
    %v27 = vld [vmem:[#allocation3] sm:$0xff]
    %v28 = vld [vmem:[%s1] sm:$0x1]
    %s29 = sld [smem:[#allocation2]]
    %v31 = vlaneseq
    %v32 = vshrl.u32 %v31, 7
    %v33 = vsub.s32 0, %v32
    %v34 = vrot.slane %v28, %v33
    %v36 = vmul.f32 %v27, %v34
    %vm37 = vcmask 261120
    %v38 = vsel %vm37, %v36, 0.0
    %39 = vadd.xlane.f32.xlu0 %v38
    %v40 = vpop.xlane.xlu0 %39
    %v41 = vstv %s29
    %v42 = vadd.f32 %v40, %v41
    %v43 = vsub.f32 0.0, %v42
    %v44 = vmul.f32 %v43, 1.442695
    %v45 = vpow.pop %v44
    %v46 = vadd.f32 %v45, 1.0
    %v47 = vrcp.pop %v46
    %v48 = vmul.f32 1.0, %v47
    %vm49 = vcmask 7168
    %50 = vst.msk [vmem:[%s3] sm:$0xff] %vm49, %v48
    // Predicated region
    $region18: #{tpu_custom_call.1} parent=1 // pred_check
      _
    $region19: #{tpu_custom_call.1} parent=1 // pred_check_branch
      %52 = sbr.rel (0) target = $region21
    $region20: #{tpu_custom_call.1} parent=1 // pred_region
      _
    $region21: #{tpu_custom_call.1} parent=1 // pred_fallthru
      _
    // Predicated region
    $region22: #{tpu_custom_call.1} parent=1 // pred_check
      _
    $region23: #{tpu_custom_call.1} parent=1 // pred_check_branch
      %54 = sbr.rel (0) target = $region25
    $region24: #{tpu_custom_call.1} parent=1 // pred_region
      _
    $region25: #{tpu_custom_call.1} parent=1 // pred_fallthru
      _
    %55 = vsyncpa [#allocation4], 1

</llo_original>
